<compile_context>
chip_gen: v7x
topology: tpu7x:2x2x1
jax: 0.10.0
libtpu: 0.0.40
codegen_flags: <defaults>
</compile_context>

<pallas_src>
import functools

import jax
import jax.numpy as jnp
from jax import lax
from jax.experimental import pallas as pl
from jax.experimental.pallas import tpu as pltpu


def _cdiv(a, b):
    return -(-a // b)


def _round_up(a, b):
    return _cdiv(a, b) * b


def _bce_dice_partial_kernel(x_ref, t_ref, bce_out, inter_out, denom_out,
                             bce_acc, inter_acc, denom_acc,
                             *, rows_valid, block_rows, steps_per_split):
    c = pl.program_id(0)          # row-range split ("parallel" -> 2 TCs on v7x)
    k = pl.program_id(1)          # streaming step within the split ("arbitrary")

    @pl.when(k == 0)
    def _():
        bce_acc[...] = jnp.zeros_like(bce_acc)
        inter_acc[...] = jnp.zeros_like(inter_acc)
        denom_acc[...] = jnp.zeros_like(denom_acc)

    def accumulate(mask):
        x = x_ref[...].astype(jnp.float32)          # (N, R, 128)
        t = t_ref[...].astype(jnp.float32)
        if mask is not None:
            # Pad rows -> (x = -1e4, t = 0): exp(-1e4) flushes to 0 in f32, so
            # masked elements contribute exactly 0 to every accumulated sum.
            x = jnp.where(mask, x, -1e4)
            t = jnp.where(mask, t, 0.0)
        # One transcendental pass: e = exp(-|x|) feeds both the numerically
        # stable BCE-with-logits and the sigmoid.
        e = jnp.exp(-jnp.abs(x))
        bce_elem = jnp.maximum(x, 0.0) - x * t + jnp.log1p(e)
        den = 1.0 + e
        rec = pl.reciprocal(den, approx=True)        # EUP slot
        rec = rec * (2.0 - den * rec)                # one Newton step -> ~f32 exact
        sig = jnp.where(x >= 0.0, rec, e * rec)
        # Reduce only over the row/sublane axis; accumulators stay lane-wide.
        bce_acc[...] += jnp.sum(bce_elem, axis=1, keepdims=True)
        inter_acc[...] += jnp.sum(sig * t, axis=1, keepdims=True)
        denom_acc[...] += jnp.sum(sig + t, axis=1, keepdims=True)

    row0 = (c * steps_per_split + k) * block_rows    # global first row of block
    in_bounds = row0 + block_rows <= rows_valid

    @pl.when(in_bounds)
    def _():
        accumulate(None)

    @pl.when(jnp.logical_not(in_bounds))
    def _():
        # Ragged (or fully padded) boundary block: mask invalid rows only here.
        rid = lax.broadcasted_iota(jnp.int32, x_ref.shape, 1)
        accumulate(rid < (rows_valid - row0))

    @pl.when(k == steps_per_split - 1)
    def _():
        bce_out[0] = bce_acc[...]
        inter_out[0] = inter_acc[...]
        denom_out[0] = denom_acc[...]


def bce_dice_loss(logits, target, *, smooth=1e-5):
    """0.5 * mean BCE-with-logits + (1 - mean dice). logits/target: (N, ...)."""
    n = logits.shape[0]
    d = 1
    for s in logits.shape[1:]:
        d *= s

    x = logits if jnp.issubdtype(logits.dtype, jnp.floating) else logits.astype(jnp.float32)
    t = target.astype(jnp.int8) if target.dtype == jnp.bool_ else target

    x2 = jnp.reshape(x, (n, d))
    t2 = jnp.reshape(t, (n, d))

    d_pad = _round_up(d, 128)
    if d_pad != d:
        # Lane tail only (< 128 elems/sample) with zero-contribution values.
        # TODO(synk): this still materializes a padded copy; only hit when D % 128 != 0.
        x2 = jnp.pad(x2, ((0, 0), (0, d_pad - d)), constant_values=-1e4)
        t2 = jnp.pad(t2, ((0, 0), (0, d_pad - d)), constant_values=0)
    rows = d_pad // 128
    x3 = jnp.reshape(x2, (n, rows, 128))
    t3 = jnp.reshape(t2, (n, rows, 128))

    # ---- Tile selection: lane/sublane-dense, ~2 MiB per input block, >= ~4 steps.
    x_item = jnp.dtype(x3.dtype).itemsize
    t_item = jnp.dtype(t3.dtype).itemsize
    gran = max(8 * max(1, 4 // x_item), 8 * max(1, 4 // t_item))   # 8/16/32 sublanes
    target_block_bytes = 2 * 1024 * 1024
    r_cap = max(gran,
                (target_block_bytes // (n * 128 * max(x_item, t_item))) // gran * gran)
    r = min(r_cap, _round_up(rows, gran))
    if rows >= 4 * gran:                        # enough work: keep >= ~4 grid steps
        r = min(r, _round_up(_cdiv(rows, 4), gran))
    if r >= rows:
        r = rows                                # single full-extent block
    num_steps = _cdiv(rows, r)

    # Split the row range across (up to) 2 TensorCores on v7x; free elsewhere.
    splits = 2 if num_steps >= 2 else 1
    steps_per_split = _cdiv(num_steps, splits)
    pad_blocks = splits * steps_per_split - num_steps

    if pad_blocks:
        def in_map(c, k):                       # clamp the single fully-padded block
            return (0, jnp.minimum(c * steps_per_split + k, num_steps - 1), 0)
    else:
        def in_map(c, k):
            return (0, c * steps_per_split + k, 0)

    part_spec = pl.BlockSpec((1, n, 1, 128), lambda c, k: (c, 0, 0, 0))
    part_shape = jax.ShapeDtypeStruct((splits, n, 1, 128), jnp.float32)

    kernel = functools.partial(
        _bce_dice_partial_kernel,
        rows_valid=rows, block_rows=r, steps_per_split=steps_per_split)

    block_bytes = n * r * 128 * (x_item + t_item)
    vmem_limit = int(min(56 * 2**20, max(32 * 2**20, 2 * block_bytes + 8 * 2**20)))

    bce_p, inter_p, denom_p = pl.pallas_call(
        kernel,
        out_shape=(part_shape, part_shape, part_shape),
        grid_spec=pltpu.PrefetchScalarGridSpec(
            num_scalar_prefetch=0,
            grid=(splits, steps_per_split),
            in_specs=[pl.BlockSpec((n, r, 128), in_map),
                      pl.BlockSpec((n, r, 128), in_map)],
            out_specs=(part_spec, part_spec, part_spec),
            scratch_shapes=[pltpu.VMEM((n, 1, 128), jnp.float32)] * 3,
        ),
        compiler_params=pltpu.CompilerParams(
            dimension_semantics=("parallel", "arbitrary"),
            vmem_limit_bytes=vmem_limit,
        ),
    )(x3, t3)

    # Tiny scalar epilogue in plain JAX (kernel outputs stay lane-dense).
    bce = jnp.sum(bce_p) / (n * d)
    inter = jnp.sum(inter_p, axis=(0, 2, 3))     # (N,)
    denom = jnp.sum(denom_p, axis=(0, 2, 3))     # (N,)
    dice = (2.0 * inter + smooth) / (denom + smooth)
    return 0.5 * bce + (1.0 - jnp.sum(dice) / n)


def _reference_loss(logits, target):
    x = logits.astype(jnp.float32)
    t = target.astype(jnp.float32)
    bce = jnp.mean(jnp.maximum(x, 0.0) - x * t + jnp.log1p(jnp.exp(-jnp.abs(x))))
    smooth = 1e-5
    n = x.shape[0]
    xi = jax.nn.sigmoid(x).reshape(n, -1)
    ti = t.reshape(n, -1)
    inter = jnp.sum(xi * ti, axis=1)
    dice = (2.0 * inter + smooth) / (jnp.sum(xi, axis=1) + jnp.sum(ti, axis=1) + smooth)
    dice = 1.0 - jnp.sum(dice) / n
    return 0.5 * bce + dice


if __name__ == "__main__":
    key = jax.random.PRNGKey(0)
    k1, k2 = jax.random.split(key)
    # Small NCHW segmentation-style logits / binary target pair.
    x = jax.random.normal(k1, (2, 4, 16, 16), dtype=jnp.float32)
    tgt = (jax.random.uniform(k2, (2, 4, 16, 16)) > 0.5).astype(jnp.float32)

    loss = jax.block_until_ready(jax.jit(bce_dice_loss)(x, tgt))
    ref = jax.block_until_ready(_reference_loss(x, tgt))

    assert jnp.allclose(loss, ref, atol=1e-5, rtol=1e-5), (loss, ref)
    print("KERNEL_OK")
</pallas_src>

<mosaic_0001>
module attributes {stable_mosaic.version = 11 : i64} {
  func.func @_bce_dice_partial_kernel(%arg0: i32, %arg1: i32, %arg2: memref<2x8x128xf32, #tpu.memory_space<vmem>>, %arg3: memref<2x8x128xf32, #tpu.memory_space<vmem>>, %arg4: memref<1x2x1x128xf32, #tpu.memory_space<vmem>>, %arg5: memref<1x2x1x128xf32, #tpu.memory_space<vmem>>, %arg6: memref<1x2x1x128xf32, #tpu.memory_space<vmem>>, %arg7: memref<2x1x128xf32, #tpu.memory_space<vmem>>, %arg8: memref<2x1x128xf32, #tpu.memory_space<vmem>>, %arg9: memref<2x1x128xf32, #tpu.memory_space<vmem>>) attributes {dimension_semantics = [#tpu.dimension_semantics<parallel>, #tpu.dimension_semantics<arbitrary>], iteration_bounds = array<i64: 1, 1>, scalar_prefetch = 0 : i64, scratch_operands = 3 : i64, tpu.core_type = #tpu.core_type<tc>, window_params = [{transform_indices = @transform_0, window_bounds = array<i64: 2, 8, 128>}, {transform_indices = @transform_1, window_bounds = array<i64: 2, 8, 128>}, {transform_indices = @transform_2, window_bounds = array<i64: 1, 2, 1, 128>}, {transform_indices = @transform_3, window_bounds = array<i64: 1, 2, 1, 128>}, {transform_indices = @transform_4, window_bounds = array<i64: 1, 2, 1, 128>}]} {
    %c0_i32 = arith.constant 0 : i32
    %0 = arith.cmpi eq, %arg1, %c0_i32 : i32
    %1 = arith.extui %0 : i1 to i32
    %c0_i32_0 = arith.constant 0 : i32
    %2 = arith.cmpi ne, %1, %c0_i32_0 : i32
    scf.if %2 {
      %cst = arith.constant 0.000000e+00 : f32
      %16 = vector.broadcast %cst : f32 to vector<2x1x128xf32>
      %c0 = arith.constant 0 : index
      %c0_7 = arith.constant 0 : index
      %c0_8 = arith.constant 0 : index
      %17 = vector.load %arg7[%c0, %c0_7, %c0_8] : memref<2x1x128xf32, #tpu.memory_space<vmem>>, vector<2x1x128xf32>
      tpu.vector_store %arg7[%c0, %c0_7, %c0_8], %16 {strides = array<i32>} : memref<2x1x128xf32, #tpu.memory_space<vmem>>, vector<2x1x128xf32>,
      %cst_9 = arith.constant 0.000000e+00 : f32
      %18 = vector.broadcast %cst_9 : f32 to vector<2x1x128xf32>
      %c0_10 = arith.constant 0 : index
      %c0_11 = arith.constant 0 : index
      %c0_12 = arith.constant 0 : index
      %19 = vector.load %arg8[%c0_10, %c0_11, %c0_12] : memref<2x1x128xf32, #tpu.memory_space<vmem>>, vector<2x1x128xf32>
      tpu.vector_store %arg8[%c0_10, %c0_11, %c0_12], %18 {strides = array<i32>} : memref<2x1x128xf32, #tpu.memory_space<vmem>>, vector<2x1x128xf32>,
      %cst_13 = arith.constant 0.000000e+00 : f32
      %20 = vector.broadcast %cst_13 : f32 to vector<2x1x128xf32>
      %c0_14 = arith.constant 0 : index
      %c0_15 = arith.constant 0 : index
      %c0_16 = arith.constant 0 : index
      %21 = vector.load %arg9[%c0_14, %c0_15, %c0_16] : memref<2x1x128xf32, #tpu.memory_space<vmem>>, vector<2x1x128xf32>
      tpu.vector_store %arg9[%c0_14, %c0_15, %c0_16], %20 {strides = array<i32>} : memref<2x1x128xf32, #tpu.memory_space<vmem>>, vector<2x1x128xf32>,
    } else {
    }
    %c1_i32 = arith.constant 1 : i32
    %3 = arith.muli %arg0, %c1_i32 : i32
    %4 = arith.addi %3, %arg1 : i32
    %c8_i32 = arith.constant 8 : i32
    %5 = arith.muli %4, %c8_i32 : i32
    %c8_i32_1 = arith.constant 8 : i32
    %6 = arith.addi %5, %c8_i32_1 : i32
    %c8_i32_2 = arith.constant 8 : i32
    %7 = arith.cmpi sle, %6, %c8_i32_2 : i32
    %8 = arith.extui %7 : i1 to i32
    %c0_i32_3 = arith.constant 0 : i32
    %9 = arith.cmpi ne, %8, %c0_i32_3 : i32
    scf.if %9 {
      %c0 = arith.constant 0 : index
      %c0_7 = arith.constant 0 : index
      %c0_8 = arith.constant 0 : index
      %16 = vector.load %arg2[%c0, %c0_7, %c0_8] : memref<2x8x128xf32, #tpu.memory_space<vmem>>, vector<2x8x128xf32>
      %c0_9 = arith.constant 0 : index
      %c0_10 = arith.constant 0 : index
      %c0_11 = arith.constant 0 : index
      %17 = vector.load %arg3[%c0_9, %c0_10, %c0_11] : memref<2x8x128xf32, #tpu.memory_space<vmem>>, vector<2x8x128xf32>
      %18 = math.absf %16 : vector<2x8x128xf32>
      %cst = arith.constant 0.000000e+00 : f32
      %19 = vector.broadcast %cst : f32 to vector<2x8x128xf32>
      %20 = arith.subf %19, %18 : vector<2x8x128xf32>
      %21 = math.exp %20 : vector<2x8x128xf32>
      %cst_12 = arith.constant 0.000000e+00 : f32
      %22 = vector.broadcast %cst_12 : f32 to vector<2x8x128xf32>
      %23 = arith.maximumf %16, %22 : vector<2x8x128xf32>
      %24 = arith.mulf %16, %17 : vector<2x8x128xf32>
      %25 = arith.subf %23, %24 : vector<2x8x128xf32>
      %26 = math.log1p %21 : vector<2x8x128xf32>
      %27 = arith.addf %25, %26 : vector<2x8x128xf32>
      %cst_13 = arith.constant 1.000000e+00 : f32
      %28 = vector.broadcast %cst_13 : f32 to vector<2x8x128xf32>
      %29 = arith.addf %28, %21 : vector<2x8x128xf32>
      %30 = tpu.reciprocal %29 {approx = true} : vector<2x8x128xf32> -> vector<2x8x128xf32>
      %31 = arith.mulf %29, %30 : vector<2x8x128xf32>
      %cst_14 = arith.constant 2.000000e+00 : f32
      %32 = vector.broadcast %cst_14 : f32 to vector<2x8x128xf32>
      %33 = arith.subf %32, %31 : vector<2x8x128xf32>
      %34 = arith.mulf %30, %33 : vector<2x8x128xf32>
      %cst_15 = arith.constant 0.000000e+00 : f32
      %35 = vector.broadcast %cst_15 : f32 to vector<2x8x128xf32>
      %36 = arith.cmpf oge, %16, %35 : vector<2x8x128xf32>
      %37 = arith.mulf %21, %34 : vector<2x8x128xf32>
      %38 = arith.select %36, %34, %37 : vector<2x8x128xi1>, vector<2x8x128xf32>
      %c0_16 = arith.constant 0 : index
      %c0_17 = arith.constant 0 : index
      %c0_18 = arith.constant 0 : index
      %39 = vector.load %arg7[%c0_16, %c0_17, %c0_18] : memref<2x1x128xf32, #tpu.memory_space<vmem>>, vector<2x1x128xf32>
      %cst_19 = arith.constant dense<0.000000e+00> : vector<2x128xf32>
      %40 = vector.multi_reduction <add>, %27, %cst_19 [1] : vector<2x8x128xf32> to vector<2x128xf32>
      %41 = vector.shape_cast %40 : vector<2x128xf32> to vector<2x1x128xf32>
      %42 = arith.addf %39, %41 : vector<2x1x128xf32>
      %c0_20 = arith.constant 0 : index
      %c0_21 = arith.constant 0 : index
      %c0_22 = arith.constant 0 : index
      %43 = vector.load %arg7[%c0_20, %c0_21, %c0_22] : memref<2x1x128xf32, #tpu.memory_space<vmem>>, vector<2x1x128xf32>
      tpu.vector_store %arg7[%c0_20, %c0_21, %c0_22], %42 {strides = array<i32>} : memref<2x1x128xf32, #tpu.memory_space<vmem>>, vector<2x1x128xf32>,
      %c0_23 = arith.constant 0 : index
      %c0_24 = arith.constant 0 : index
      %c0_25 = arith.constant 0 : index
      %44 = vector.load %arg8[%c0_23, %c0_24, %c0_25] : memref<2x1x128xf32, #tpu.memory_space<vmem>>, vector<2x1x128xf32>
      %45 = arith.mulf %38, %17 : vector<2x8x128xf32>
      %cst_26 = arith.constant dense<0.000000e+00> : vector<2x128xf32>
      %46 = vector.multi_reduction <add>, %45, %cst_26 [1] : vector<2x8x128xf32> to vector<2x128xf32>
      %47 = vector.shape_cast %46 : vector<2x128xf32> to vector<2x1x128xf32>
      %48 = arith.addf %44, %47 : vector<2x1x128xf32>
      %c0_27 = arith.constant 0 : index
      %c0_28 = arith.constant 0 : index
      %c0_29 = arith.constant 0 : index
      %49 = vector.load %arg8[%c0_27, %c0_28, %c0_29] : memref<2x1x128xf32, #tpu.memory_space<vmem>>, vector<2x1x128xf32>
      tpu.vector_store %arg8[%c0_27, %c0_28, %c0_29], %48 {strides = array<i32>} : memref<2x1x128xf32, #tpu.memory_space<vmem>>, vector<2x1x128xf32>,
      %c0_30 = arith.constant 0 : index
      %c0_31 = arith.constant 0 : index
      %c0_32 = arith.constant 0 : index
      %50 = vector.load %arg9[%c0_30, %c0_31, %c0_32] : memref<2x1x128xf32, #tpu.memory_space<vmem>>, vector<2x1x128xf32>
      %51 = arith.addf %38, %17 : vector<2x8x128xf32>
      %cst_33 = arith.constant dense<0.000000e+00> : vector<2x128xf32>
      %52 = vector.multi_reduction <add>, %51, %cst_33 [1] : vector<2x8x128xf32> to vector<2x128xf32>
      %53 = vector.shape_cast %52 : vector<2x128xf32> to vector<2x1x128xf32>
      %54 = arith.addf %50, %53 : vector<2x1x128xf32>
      %c0_34 = arith.constant 0 : index
      %c0_35 = arith.constant 0 : index
      %c0_36 = arith.constant 0 : index
      %55 = vector.load %arg9[%c0_34, %c0_35, %c0_36] : memref<2x1x128xf32, #tpu.memory_space<vmem>>, vector<2x1x128xf32>
      tpu.vector_store %arg9[%c0_34, %c0_35, %c0_36], %54 {strides = array<i32>} : memref<2x1x128xf32, #tpu.memory_space<vmem>>, vector<2x1x128xf32>,
    } else {
    }
    %true = arith.constant true
    %10 = arith.xori %7, %true : i1
    %11 = arith.extui %10 : i1 to i32
    %c0_i32_4 = arith.constant 0 : i32
    %12 = arith.cmpi ne, %11, %c0_i32_4 : i32
    scf.if %12 {
      %16 = tpu.iota {dimensions = array<i32: 1>} : vector<2x8x128xi32>
      %c8_i32_7 = arith.constant 8 : i32
      %17 = arith.subi %c8_i32_7, %5 : i32
      %18 = vector.broadcast %17 : i32 to vector<2x8x128xi32>
      %19 = arith.cmpi slt, %16, %18 : vector<2x8x128xi32>
      %c0 = arith.constant 0 : index
      %c0_8 = arith.constant 0 : index
      %c0_9 = arith.constant 0 : index
      %20 = vector.load %arg2[%c0, %c0_8, %c0_9] : memref<2x8x128xf32, #tpu.memory_space<vmem>>, vector<2x8x128xf32>
      %c0_10 = arith.constant 0 : index
      %c0_11 = arith.constant 0 : index
      %c0_12 = arith.constant 0 : index
      %21 = vector.load %arg3[%c0_10, %c0_11, %c0_12] : memref<2x8x128xf32, #tpu.memory_space<vmem>>, vector<2x8x128xf32>
      %cst = arith.constant -1.000000e+04 : f32
      %22 = vector.broadcast %cst : f32 to vector<2x8x128xf32>
      %23 = arith.select %19, %20, %22 : vector<2x8x128xi1>, vector<2x8x128xf32>
      %cst_13 = arith.constant 0.000000e+00 : f32
      %24 = vector.broadcast %cst_13 : f32 to vector<2x8x128xf32>
      %25 = arith.select %19, %21, %24 : vector<2x8x128xi1>, vector<2x8x128xf32>
      %26 = math.absf %23 : vector<2x8x128xf32>
      %cst_14 = arith.constant 0.000000e+00 : f32
      %27 = vector.broadcast %cst_14 : f32 to vector<2x8x128xf32>
      %28 = arith.subf %27, %26 : vector<2x8x128xf32>
      %29 = math.exp %28 : vector<2x8x128xf32>
      %cst_15 = arith.constant 0.000000e+00 : f32
      %30 = vector.broadcast %cst_15 : f32 to vector<2x8x128xf32>
      %31 = arith.maximumf %23, %30 : vector<2x8x128xf32>
      %32 = arith.mulf %23, %25 : vector<2x8x128xf32>
      %33 = arith.subf %31, %32 : vector<2x8x128xf32>
      %34 = math.log1p %29 : vector<2x8x128xf32>
      %35 = arith.addf %33, %34 : vector<2x8x128xf32>
      %cst_16 = arith.constant 1.000000e+00 : f32
      %36 = vector.broadcast %cst_16 : f32 to vector<2x8x128xf32>
      %37 = arith.addf %36, %29 : vector<2x8x128xf32>
      %38 = tpu.reciprocal %37 {approx = true} : vector<2x8x128xf32> -> vector<2x8x128xf32>
      %39 = arith.mulf %37, %38 : vector<2x8x128xf32>
      %cst_17 = arith.constant 2.000000e+00 : f32
      %40 = vector.broadcast %cst_17 : f32 to vector<2x8x128xf32>
      %41 = arith.subf %40, %39 : vector<2x8x128xf32>
      %42 = arith.mulf %38, %41 : vector<2x8x128xf32>
      %cst_18 = arith.constant 0.000000e+00 : f32
      %43 = vector.broadcast %cst_18 : f32 to vector<2x8x128xf32>
      %44 = arith.cmpf oge, %23, %43 : vector<2x8x128xf32>
      %45 = arith.mulf %29, %42 : vector<2x8x128xf32>
      %46 = arith.select %44, %42, %45 : vector<2x8x128xi1>, vector<2x8x128xf32>
      %c0_19 = arith.constant 0 : index
      %c0_20 = arith.constant 0 : index
      %c0_21 = arith.constant 0 : index
      %47 = vector.load %arg7[%c0_19, %c0_20, %c0_21] : memref<2x1x128xf32, #tpu.memory_space<vmem>>, vector<2x1x128xf32>
      %cst_22 = arith.constant dense<0.000000e+00> : vector<2x128xf32>
      %48 = vector.multi_reduction <add>, %35, %cst_22 [1] : vector<2x8x128xf32> to vector<2x128xf32>
      %49 = vector.shape_cast %48 : vector<2x128xf32> to vector<2x1x128xf32>
      %50 = arith.addf %47, %49 : vector<2x1x128xf32>
      %c0_23 = arith.constant 0 : index
      %c0_24 = arith.constant 0 : index
      %c0_25 = arith.constant 0 : index
      %51 = vector.load %arg7[%c0_23, %c0_24, %c0_25] : memref<2x1x128xf32, #tpu.memory_space<vmem>>, vector<2x1x128xf32>
      tpu.vector_store %arg7[%c0_23, %c0_24, %c0_25], %50 {strides = array<i32>} : memref<2x1x128xf32, #tpu.memory_space<vmem>>, vector<2x1x128xf32>,
      %c0_26 = arith.constant 0 : index
      %c0_27 = arith.constant 0 : index
      %c0_28 = arith.constant 0 : index
      %52 = vector.load %arg8[%c0_26, %c0_27, %c0_28] : memref<2x1x128xf32, #tpu.memory_space<vmem>>, vector<2x1x128xf32>
      %53 = arith.mulf %46, %25 : vector<2x8x128xf32>
      %cst_29 = arith.constant dense<0.000000e+00> : vector<2x128xf32>
      %54 = vector.multi_reduction <add>, %53, %cst_29 [1] : vector<2x8x128xf32> to vector<2x128xf32>
      %55 = vector.shape_cast %54 : vector<2x128xf32> to vector<2x1x128xf32>
      %56 = arith.addf %52, %55 : vector<2x1x128xf32>
      %c0_30 = arith.constant 0 : index
      %c0_31 = arith.constant 0 : index
      %c0_32 = arith.constant 0 : index
      %57 = vector.load %arg8[%c0_30, %c0_31, %c0_32] : memref<2x1x128xf32, #tpu.memory_space<vmem>>, vector<2x1x128xf32>
      tpu.vector_store %arg8[%c0_30, %c0_31, %c0_32], %56 {strides = array<i32>} : memref<2x1x128xf32, #tpu.memory_space<vmem>>, vector<2x1x128xf32>,
      %c0_33 = arith.constant 0 : index
      %c0_34 = arith.constant 0 : index
      %c0_35 = arith.constant 0 : index
      %58 = vector.load %arg9[%c0_33, %c0_34, %c0_35] : memref<2x1x128xf32, #tpu.memory_space<vmem>>, vector<2x1x128xf32>
      %59 = arith.addf %46, %25 : vector<2x8x128xf32>
      %cst_36 = arith.constant dense<0.000000e+00> : vector<2x128xf32>
      %60 = vector.multi_reduction <add>, %59, %cst_36 [1] : vector<2x8x128xf32> to vector<2x128xf32>
      %61 = vector.shape_cast %60 : vector<2x128xf32> to vector<2x1x128xf32>
      %62 = arith.addf %58, %61 : vector<2x1x128xf32>
      %c0_37 = arith.constant 0 : index
      %c0_38 = arith.constant 0 : index
      %c0_39 = arith.constant 0 : index
      %63 = vector.load %arg9[%c0_37, %c0_38, %c0_39] : memref<2x1x128xf32, #tpu.memory_space<vmem>>, vector<2x1x128xf32>
      tpu.vector_store %arg9[%c0_37, %c0_38, %c0_39], %62 {strides = array<i32>} : memref<2x1x128xf32, #tpu.memory_space<vmem>>, vector<2x1x128xf32>,
    } else {
    }
    %c0_i32_5 = arith.constant 0 : i32
    %13 = arith.cmpi eq, %arg1, %c0_i32_5 : i32
    %14 = arith.extui %13 : i1 to i32
    %c0_i32_6 = arith.constant 0 : i32
    %15 = arith.cmpi ne, %14, %c0_i32_6 : i32
    scf.if %15 {
      %c0 = arith.constant 0 : index
      %c0_7 = arith.constant 0 : index
      %c0_8 = arith.constant 0 : index
      %16 = vector.load %arg7[%c0, %c0_7, %c0_8] : memref<2x1x128xf32, #tpu.memory_space<vmem>>, vector<2x1x128xf32>
      %c0_9 = arith.constant 0 : index
      %c0_10 = arith.constant 0 : index
      %c0_11 = arith.constant 0 : index
      %c0_12 = arith.constant 0 : index
      %17 = vector.load %arg4[%c0_9, %c0_10, %c0_11, %c0_12] : memref<1x2x1x128xf32, #tpu.memory_space<vmem>>, vector<1x2x1x128xf32>
      %18 = vector.shape_cast %17 : vector<1x2x1x128xf32> to vector<2x1x128xf32>
      %19 = vector.shape_cast %16 : vector<2x1x128xf32> to vector<1x2x1x128xf32>
      tpu.vector_store %arg4[%c0_9, %c0_10, %c0_11, %c0_12], %19 {strides = array<i32>} : memref<1x2x1x128xf32, #tpu.memory_space<vmem>>, vector<1x2x1x128xf32>,
      %c0_13 = arith.constant 0 : index
      %c0_14 = arith.constant 0 : index
      %c0_15 = arith.constant 0 : index
      %20 = vector.load %arg8[%c0_13, %c0_14, %c0_15] : memref<2x1x128xf32, #tpu.memory_space<vmem>>, vector<2x1x128xf32>
      %c0_16 = arith.constant 0 : index
      %c0_17 = arith.constant 0 : index
      %c0_18 = arith.constant 0 : index
      %c0_19 = arith.constant 0 : index
      %21 = vector.load %arg5[%c0_16, %c0_17, %c0_18, %c0_19] : memref<1x2x1x128xf32, #tpu.memory_space<vmem>>, vector<1x2x1x128xf32>
      %22 = vector.shape_cast %21 : vector<1x2x1x128xf32> to vector<2x1x128xf32>
      %23 = vector.shape_cast %20 : vector<2x1x128xf32> to vector<1x2x1x128xf32>
      tpu.vector_store %arg5[%c0_16, %c0_17, %c0_18, %c0_19], %23 {strides = array<i32>} : memref<1x2x1x128xf32, #tpu.memory_space<vmem>>, vector<1x2x1x128xf32>,
      %c0_20 = arith.constant 0 : index
      %c0_21 = arith.constant 0 : index
      %c0_22 = arith.constant 0 : index
      %24 = vector.load %arg9[%c0_20, %c0_21, %c0_22] : memref<2x1x128xf32, #tpu.memory_space<vmem>>, vector<2x1x128xf32>
      %c0_23 = arith.constant 0 : index
      %c0_24 = arith.constant 0 : index
      %c0_25 = arith.constant 0 : index
      %c0_26 = arith.constant 0 : index
      %25 = vector.load %arg6[%c0_23, %c0_24, %c0_25, %c0_26] : memref<1x2x1x128xf32, #tpu.memory_space<vmem>>, vector<1x2x1x128xf32>
      %26 = vector.shape_cast %25 : vector<1x2x1x128xf32> to vector<2x1x128xf32>
      %27 = vector.shape_cast %24 : vector<2x1x128xf32> to vector<1x2x1x128xf32>
      tpu.vector_store %arg6[%c0_23, %c0_24, %c0_25, %c0_26], %27 {strides = array<i32>} : memref<1x2x1x128xf32, #tpu.memory_space<vmem>>, vector<1x2x1x128xf32>,
    } else {
    }
    return
  }
  func.func @transform_0(%arg0: i32, %arg1: i32) -> (i32, i32, i32) {
    %c1_i32 = arith.constant 1 : i32
    %0 = arith.muli %arg0, %c1_i32 : i32
    %1 = arith.addi %0, %arg1 : i32
    %c0_i32 = arith.constant 0 : i32
    %c0_i32_0 = arith.constant 0 : i32
    %c0_i32_1 = arith.constant 0 : i32
    return %c0_i32, %1, %c0_i32_0 : i32, i32, i32
  }
  func.func @transform_1(%arg0: i32, %arg1: i32) -> (i32, i32, i32) {
    %c1_i32 = arith.constant 1 : i32
    %0 = arith.muli %arg0, %c1_i32 : i32
    %1 = arith.addi %0, %arg1 : i32
    %c0_i32 = arith.constant 0 : i32
    %c0_i32_0 = arith.constant 0 : i32
    %c0_i32_1 = arith.constant 0 : i32
    return %c0_i32, %1, %c0_i32_0 : i32, i32, i32
  }
  func.func @transform_2(%arg0: i32, %arg1: i32) -> (i32, i32, i32, i32) {
    %c0_i32 = arith.constant 0 : i32
    %c0_i32_0 = arith.constant 0 : i32
    %c0_i32_1 = arith.constant 0 : i32
    %c0_i32_2 = arith.constant 0 : i32
    return %arg0, %c0_i32, %c0_i32_0, %c0_i32_1 : i32, i32, i32, i32
  }
  func.func @transform_3(%arg0: i32, %arg1: i32) -> (i32, i32, i32, i32) {
    %c0_i32 = arith.constant 0 : i32
    %c0_i32_0 = arith.constant 0 : i32
    %c0_i32_1 = arith.constant 0 : i32
    %c0_i32_2 = arith.constant 0 : i32
    return %arg0, %c0_i32, %c0_i32_0, %c0_i32_1 : i32, i32, i32, i32
  }
  func.func @transform_4(%arg0: i32, %arg1: i32) -> (i32, i32, i32, i32) {
    %c0_i32 = arith.constant 0 : i32
    %c0_i32_0 = arith.constant 0 : i32
    %c0_i32_1 = arith.constant 0 : i32
    %c0_i32_2 = arith.constant 0 : i32
    return %arg0, %c0_i32, %c0_i32_0, %c0_i32_1 : i32, i32, i32, i32
  }
}

</mosaic_0001>

<llo_original>
// kernel: bce_dice_loss.1
$region0: #{bce_dice_loss.1}
  #allocation0 [shape = 'u32[]', space=smem, size = 0x4, offset = 0x4, fixed_abs, tag = 'smem constant byte address 0x4 - core index']
  #allocation1 [shape = 'u32[144,128]{1,0:T(1,128)}', space=vmem, size = 0x12000, scoped, tag = 'internal scratch']
  #allocation2 [shape = 'f32[2,1,128]{2,1,0:T(1,128)}', space=vmem, size = 0x400, scoped, tag = 'scratch operand']
  #allocation3 [shape = 'f32[2,1,128]{2,1,0:T(1,128)}', space=vmem, size = 0x400, scoped, tag = 'scratch operand']
  #allocation4 [shape = 'f32[2,1,128]{2,1,0:T(1,128)}', space=vmem, size = 0x400, scoped, tag = 'scratch operand']
  %s0 = inlined_call_operand.vmem [shape: f32[2,8,128], index: 0, kind: input, shape index: {}]
  %s1 = inlined_call_operand.vmem [shape: f32[2,8,128], index: 1, kind: input, shape index: {}]
  %s2 = inlined_call_operand.vmem [shape: f32[1,2,1,128], index: 2, kind: output, shape index: {0}]
  %s3 = inlined_call_operand.vmem [shape: f32[1,2,1,128], index: 3, kind: output, shape index: {1}]
  %s4 = inlined_call_operand.vmem [shape: f32[1,2,1,128], index: 4, kind: output, shape index: {2}]
  %5 = xla_tuple %s2, %s3, %s4
  %s6 = sld [smem:[#allocation0]]
  $region50: #{bce_dice_loss.1} parent=0
    _
  %s8 = ssub.s32 1, %s6
  %s9 = scalar_select 0, %s8, %s6
  // Predicated region
  $region2: #{bce_dice_loss.1} parent=0 // pred_check
    _
  $region3: #{bce_dice_loss.1} parent=0 // pred_check_branch
    %11 = sbr.rel (0) target = $region5
  $region4: #{bce_dice_loss.1} parent=0 // pred_region
    %s12 = sadd.s32 0, 0
    %p13 = scmp.lt.s32.totalorder %s12, 0
    %s14 = scalar_select %p13, %s12, 0
    %s15 = smul.addr %s14, 8
    %s16 = scalar_lea.vmem %s0, %s15
    %s17 = sadd.s32 0, 0
  $region5: #{bce_dice_loss.1} parent=0 // pred_fallthru
    _
  // Predicated region
  $region6: #{bce_dice_loss.1} parent=0 // pred_check
    _
  $region7: #{bce_dice_loss.1} parent=0 // pred_check_branch
    %19 = sbr.rel (0) target = $region9
  $region8: #{bce_dice_loss.1} parent=0 // pred_region
    %s20 = sadd.s32 0, 0
    %p21 = scmp.lt.s32.totalorder %s20, 0
    %s22 = scalar_select %p21, %s20, 0
    %s23 = smul.addr %s22, 8
    %s24 = scalar_lea.vmem %s1, %s23
    %s25 = sadd.s32 0, 0
  $region9: #{bce_dice_loss.1} parent=0 // pred_fallthru
    _
  %s26 = sadd.s32 0, 0
  %p27 = scmp.lt.s32.totalorder %s26, 0
  %s28 = scalar_select %p27, %s26, 0
  %s29 = smul.addr %s28, 8
  %s30 = scalar_lea.vmem %s0, %s29
  %s31 = sadd.s32 0, 0
  %p32 = scmp.lt.s32.totalorder %s31, 0
  %s33 = scalar_select %p32, %s31, 0
  %s34 = smul.addr %s33, 8
  %s35 = scalar_lea.vmem %s1, %s34
  %s36 = sadd.s32 0, 0
  %p37 = scmp.lt.s32.totalorder %s36, 0
  %s38 = scalar_select %p37, %s36, 0
  %s39 = smul.addr %s38, 8
  %s40 = scalar_lea.vmem %s0, %s39
  %s41 = sadd.s32 0, 0
  %s42 = sadd.s32 0, 0
  %p43 = scmp.lt.s32.totalorder %s42, 0
  %s44 = scalar_select %p43, %s42, 0
  %s45 = smul.addr %s44, 8
  %s46 = scalar_lea.vmem %s1, %s45
  %s47 = sadd.s32 0, 0
  %p48 = scmp.eq.s32.totalorder 0, 0
  // Predicated region
  $region10: #{bce_dice_loss.1} parent=0 // pred_check
    %p49 = pneg %p48
  $region11: #{bce_dice_loss.1} parent=0 // pred_check_branch
    %51 = sbr.rel (%p49) target = $region13
  $region12: #{bce_dice_loss.1} parent=0 // pred_region
    %52 = vst [vmem:[#allocation2] sm:$0x1] 0.0
    %53 = vst [vmem:[#allocation2 + $0x1] sm:$0x1] 0.0
    %54 = vst [vmem:[#allocation3] sm:$0x1] 0.0
    %55 = vst [vmem:[#allocation3 + $0x1] sm:$0x1] 0.0
    %56 = vst [vmem:[#allocation4] sm:$0x1] 0.0
    %57 = vst [vmem:[#allocation4 + $0x1] sm:$0x1] 0.0
  $region13: #{bce_dice_loss.1} parent=0 // pred_fallthru
    _
  %s58 = sadd.s32 0, 0
  %s59 = smul.u32 %s58, 8
  %s60 = sadd.s32 %s59, 8
  %p61 = scmp.le.s32.totalorder %s60, 8
  // Predicated region
  $region14: #{bce_dice_loss.1} parent=0 // pred_check
    %p62 = pneg %p61
  $region15: #{bce_dice_loss.1} parent=0 // pred_check_branch
    %64 = sbr.rel (%p62) target = $region17
  $region16: #{bce_dice_loss.1} parent=0 // pred_region
    %v65 = vld [vmem:[%s40] sm:$0xff]
    %v66 = vld [vmem:[%s40 + $0x8] sm:$0xff]
    %v67 = vld [vmem:[%s46] sm:$0xff]
    %v68 = vld [vmem:[%s46 + $0x8] sm:$0xff]
    %v69 = vand.u32 2147483647, %v65
    %v70 = vand.u32 2147483647, %v66
    %v71 = vsub.f32 0.0, %v69
    %v72 = vsub.f32 0.0, %v70
    %v73 = vmul.f32 %v71, 1.442695
    %v74 = vpow.pop %v73
    %v75 = vmul.f32 %v72, 1.442695
    %v76 = vpow.pop %v75
    %v77 = vmax.f32 %v65, 0.0
    %v78 = vmax.f32 %v66, 0.0
    %v79 = vmul.f32 %v65, %v67
    %v80 = vmul.f32 %v66, %v68
    %v81 = vsub.f32 %v77, %v79
    %v82 = vsub.f32 %v78, %v80
    %v83 = vadd.f32 %v74, 1.0
    %v84 = vlog2.pop %v83
    %v85 = vmul.f32 %v84, 0.6931472
    %v86 = vmul.f32 -0.5, %v74
    %v87 = vadd.f32 %v86, 1.0
    %v88 = vmul.f32 %v87, %v74
    %v89 = vand.u32 2147483647, %v74
    %vm90 = vcmp.lt.f32.partialorder %v89, 0.0004427343
    %v91 = vsel %vm90, %v88, %v85
    %v92 = vadd.f32 %v76, 1.0
    %v93 = vlog2.pop %v92
    %v94 = vmul.f32 %v93, 0.6931472
    %v95 = vmul.f32 -0.5, %v76
    %v96 = vadd.f32 %v95, 1.0
    %v97 = vmul.f32 %v96, %v76
    %v98 = vand.u32 2147483647, %v76
    %vm99 = vcmp.lt.f32.partialorder %v98, 0.0004427343
    %v100 = vsel %vm99, %v97, %v94
    %v101 = vadd.f32 %v81, %v91
    %v102 = vadd.f32 %v82, %v100
    %v103 = vadd.f32 %v74, 1.0
    %v104 = vadd.f32 %v76, 1.0
    %v105 = vrcp.pop %v103
    %v106 = vrcp.pop %v104
    %v107 = vmul.f32 %v103, %v105
    %v108 = vmul.f32 %v104, %v106
    %v109 = vsub.f32 2.0, %v107
    %v110 = vsub.f32 2.0, %v108
    %v111 = vmul.f32 %v105, %v109
    %v112 = vmul.f32 %v106, %v110
    %vm113 = vcmp.ge.f32.partialorder %v65, 0.0
    %vm114 = vcmp.ge.f32.partialorder %v66, 0.0
    %v115 = vmul.f32 %v74, %v111
    %v116 = vmul.f32 %v76, %v112
    %v117 = vsel %vm113, %v111, %v115
    %v118 = vsel %vm114, %v112, %v116
    %v119 = vld [vmem:[#allocation2] sm:$0x1]
    %v120 = vld [vmem:[#allocation2 + $0x1] sm:$0x1]
    %v121 = vrot.slane %v101, 4
    %v122 = vadd.f32 %v101, %v121
    %v123 = vrot.slane %v122, 2
    %v124 = vadd.f32 %v122, %v123
    %v125 = vrot.slane %v124, 1
    %v126 = vadd.f32 %v124, %v125
    %v127 = vrot.slane %v102, 4
    %v128 = vadd.f32 %v102, %v127
    %v129 = vrot.slane %v128, 2
    %v130 = vadd.f32 %v128, %v129
    %v131 = vrot.slane %v130, 1
    %v132 = vadd.f32 %v130, %v131
    %v133 = vadd.f32 %v119, %v126
    %v134 = vadd.f32 %v120, %v132
    %135 = vst [vmem:[#allocation2] sm:$0x1] %v133
    %136 = vst [vmem:[#allocation2 + $0x1] sm:$0x1] %v134
    %v137 = vld [vmem:[#allocation3] sm:$0x1]
    %v138 = vld [vmem:[#allocation3 + $0x1] sm:$0x1]
    %v139 = vmul.f32 %v117, %v67
    %v140 = vmul.f32 %v118, %v68
    %v141 = vrot.slane %v139, 4
    %v142 = vadd.f32 %v139, %v141
    %v143 = vrot.slane %v142, 2
    %v144 = vadd.f32 %v142, %v143
    %v145 = vrot.slane %v144, 1
    %v146 = vadd.f32 %v144, %v145
    %v147 = vrot.slane %v140, 4
    %v148 = vadd.f32 %v140, %v147
    %v149 = vrot.slane %v148, 2
    %v150 = vadd.f32 %v148, %v149
    %v151 = vrot.slane %v150, 1
    %v152 = vadd.f32 %v150, %v151
    %v153 = vadd.f32 %v137, %v146
    %v154 = vadd.f32 %v138, %v152
    %155 = vst [vmem:[#allocation3] sm:$0x1] %v153
    %156 = vst [vmem:[#allocation3 + $0x1] sm:$0x1] %v154
    %v157 = vld [vmem:[#allocation4] sm:$0x1]
    %v158 = vld [vmem:[#allocation4 + $0x1] sm:$0x1]
    %v159 = vadd.f32 %v117, %v67
    %v160 = vadd.f32 %v118, %v68
    %v161 = vrot.slane %v159, 4
    %v162 = vadd.f32 %v159, %v161
    %v163 = vrot.slane %v162, 2
    %v164 = vadd.f32 %v162, %v163
    %v165 = vrot.slane %v164, 1
    %v166 = vadd.f32 %v164, %v165
    %v167 = vrot.slane %v160, 4
    %v168 = vadd.f32 %v160, %v167
    %v169 = vrot.slane %v168, 2
    %v170 = vadd.f32 %v168, %v169
    %v171 = vrot.slane %v170, 1
    %v172 = vadd.f32 %v170, %v171
    %v173 = vadd.f32 %v157, %v166
    %v174 = vadd.f32 %v158, %v172
    %175 = vst [vmem:[#allocation4] sm:$0x1] %v173
    %176 = vst [vmem:[#allocation4 + $0x1] sm:$0x1] %v174
  $region17: #{bce_dice_loss.1} parent=0 // pred_fallthru
    _
  %p177 = scmp.gt.s32.totalorder %s60, 8
  // Predicated region
  $region18: #{bce_dice_loss.1} parent=0 // pred_check
    %p178 = pneg %p177
  $region19: #{bce_dice_loss.1} parent=0 // pred_check_branch
    %180 = sbr.rel (%p178) target = $region21
  $region20: #{bce_dice_loss.1} parent=0 // pred_region
    %v181 = vlaneseq
    %v182 = vshrl.u32 %v181, 7
    %s183 = ssub.s32 8, %s59
    %v184 = vstv %s183
    %vm185 = vcmp.lt.s32.totalorder %v182, %v184
    %v186 = vld [vmem:[%s40] sm:$0xff]
    %v187 = vld [vmem:[%s40 + $0x8] sm:$0xff]
    %v188 = vld [vmem:[%s46] sm:$0xff]
    %v189 = vld [vmem:[%s46 + $0x8] sm:$0xff]
    %v190 = vsel %vm185, %v186, -10000.0
    %v191 = vsel %vm185, %v187, -10000.0
    %v192 = vsel %vm185, %v188, 0.0
    %v193 = vsel %vm185, %v189, 0.0
    %v194 = vand.u32 2147483647, %v190
    %v195 = vand.u32 2147483647, %v191
    %v196 = vsub.f32 0.0, %v194
    %v197 = vsub.f32 0.0, %v195
    %v198 = vmul.f32 %v196, 1.442695
    %v199 = vpow.pop %v198
    %v200 = vmul.f32 %v197, 1.442695
    %v201 = vpow.pop %v200
    %v202 = vmax.f32 %v190, 0.0
    %v203 = vmax.f32 %v191, 0.0
    %v204 = vmul.f32 %v190, %v192
    %v205 = vmul.f32 %v191, %v193
    %v206 = vsub.f32 %v202, %v204
    %v207 = vsub.f32 %v203, %v205
    %v208 = vadd.f32 %v199, 1.0
    %v209 = vlog2.pop %v208
    %v210 = vmul.f32 %v209, 0.6931472
    %v211 = vmul.f32 -0.5, %v199
    %v212 = vadd.f32 %v211, 1.0
    %v213 = vmul.f32 %v212, %v199
    %v214 = vand.u32 2147483647, %v199
    %vm215 = vcmp.lt.f32.partialorder %v214, 0.0004427343
    %v216 = vsel %vm215, %v213, %v210
    %v217 = vadd.f32 %v201, 1.0
    %v218 = vlog2.pop %v217
    %v219 = vmul.f32 %v218, 0.6931472
    %v220 = vmul.f32 -0.5, %v201
    %v221 = vadd.f32 %v220, 1.0
    %v222 = vmul.f32 %v221, %v201
    %v223 = vand.u32 2147483647, %v201
    %vm224 = vcmp.lt.f32.partialorder %v223, 0.0004427343
    %v225 = vsel %vm224, %v222, %v219
    %v226 = vadd.f32 %v206, %v216
    %v227 = vadd.f32 %v207, %v225
    %v228 = vadd.f32 %v199, 1.0
    %v229 = vadd.f32 %v201, 1.0
    %v230 = vrcp.pop %v228
    %v231 = vrcp.pop %v229
    %v232 = vmul.f32 %v228, %v230
    %v233 = vmul.f32 %v229, %v231
    %v234 = vsub.f32 2.0, %v232
    %v235 = vsub.f32 2.0, %v233
    %v236 = vmul.f32 %v230, %v234
    %v237 = vmul.f32 %v231, %v235
    %vm238 = vcmp.ge.f32.partialorder %v190, 0.0
    %vm239 = vcmp.ge.f32.partialorder %v191, 0.0
    %v240 = vmul.f32 %v199, %v236
    %v241 = vmul.f32 %v201, %v237
    %v242 = vsel %vm238, %v236, %v240
    %v243 = vsel %vm239, %v237, %v241
    %v244 = vld [vmem:[#allocation2] sm:$0x1]
    %v245 = vld [vmem:[#allocation2 + $0x1] sm:$0x1]
    %v246 = vrot.slane %v226, 4
    %v247 = vadd.f32 %v226, %v246
    %v248 = vrot.slane %v247, 2
    %v249 = vadd.f32 %v247, %v248
    %v250 = vrot.slane %v249, 1
    %v251 = vadd.f32 %v249, %v250
    %v252 = vrot.slane %v227, 4
    %v253 = vadd.f32 %v227, %v252
    %v254 = vrot.slane %v253, 2
    %v255 = vadd.f32 %v253, %v254
    %v256 = vrot.slane %v255, 1
    %v257 = vadd.f32 %v255, %v256
    %v258 = vadd.f32 %v244, %v251
    %v259 = vadd.f32 %v245, %v257
    %260 = vst [vmem:[#allocation2] sm:$0x1] %v258
    %261 = vst [vmem:[#allocation2 + $0x1] sm:$0x1] %v259
    %v262 = vld [vmem:[#allocation3] sm:$0x1]
    %v263 = vld [vmem:[#allocation3 + $0x1] sm:$0x1]
    %v264 = vmul.f32 %v242, %v192
    %v265 = vmul.f32 %v243, %v193
    %v266 = vrot.slane %v264, 4
    %v267 = vadd.f32 %v264, %v266
    %v268 = vrot.slane %v267, 2
    %v269 = vadd.f32 %v267, %v268
    %v270 = vrot.slane %v269, 1
    %v271 = vadd.f32 %v269, %v270
    %v272 = vrot.slane %v265, 4
    %v273 = vadd.f32 %v265, %v272
    %v274 = vrot.slane %v273, 2
    %v275 = vadd.f32 %v273, %v274
    %v276 = vrot.slane %v275, 1
    %v277 = vadd.f32 %v275, %v276
    %v278 = vadd.f32 %v262, %v271
    %v279 = vadd.f32 %v263, %v277
    %280 = vst [vmem:[#allocation3] sm:$0x1] %v278
    %281 = vst [vmem:[#allocation3 + $0x1] sm:$0x1] %v279
    %v282 = vld [vmem:[#allocation4] sm:$0x1]
    %v283 = vld [vmem:[#allocation4 + $0x1] sm:$0x1]
    %v284 = vadd.f32 %v242, %v192
    %v285 = vadd.f32 %v243, %v193
    %v286 = vrot.slane %v284, 4
    %v287 = vadd.f32 %v284, %v286
    %v288 = vrot.slane %v287, 2
    %v289 = vadd.f32 %v287, %v288
    %v290 = vrot.slane %v289, 1
    %v291 = vadd.f32 %v289, %v290
    %v292 = vrot.slane %v285, 4
    %v293 = vadd.f32 %v285, %v292
    %v294 = vrot.slane %v293, 2
    %v295 = vadd.f32 %v293, %v294
    %v296 = vrot.slane %v295, 1
    %v297 = vadd.f32 %v295, %v296
    %v298 = vadd.f32 %v282, %v291
    %v299 = vadd.f32 %v283, %v297
    %300 = vst [vmem:[#allocation4] sm:$0x1] %v298
    %301 = vst [vmem:[#allocation4 + $0x1] sm:$0x1] %v299
  $region21: #{bce_dice_loss.1} parent=0 // pred_fallthru
    _
  // Predicated region
  $region22: #{bce_dice_loss.1} parent=0 // pred_check
    %p302 = pneg %p48
  $region23: #{bce_dice_loss.1} parent=0 // pred_check_branch
    %304 = sbr.rel (%p302) target = $region25
  $region24: #{bce_dice_loss.1} parent=0 // pred_region
    %v305 = vld [vmem:[#allocation2] sm:$0x1]
    %v306 = vld [vmem:[#allocation2 + $0x1] sm:$0x1]
    %307 = vst [vmem:[%s2] sm:$0x1] %v305
    %308 = vst [vmem:[%s2 + $0x1] sm:$0x1] %v306
    %v309 = vld [vmem:[#allocation3] sm:$0x1]
    %v310 = vld [vmem:[#allocation3 + $0x1] sm:$0x1]
    %311 = vst [vmem:[%s3] sm:$0x1] %v309
    %312 = vst [vmem:[%s3 + $0x1] sm:$0x1] %v310
    %v313 = vld [vmem:[#allocation4] sm:$0x1]
    %v314 = vld [vmem:[#allocation4 + $0x1] sm:$0x1]
    %315 = vst [vmem:[%s4] sm:$0x1] %v313
    %316 = vst [vmem:[%s4 + $0x1] sm:$0x1] %v314
  $region25: #{bce_dice_loss.1} parent=0 // pred_fallthru
    _
  // Predicated region
  $region26: #{bce_dice_loss.1} parent=0 // pred_check
    _
  $region27: #{bce_dice_loss.1} parent=0 // pred_check_branch
    %318 = sbr.rel (0) target = $region29
  $region28: #{bce_dice_loss.1} parent=0 // pred_region
    _
  $region29: #{bce_dice_loss.1} parent=0 // pred_fallthru
    _
  // Predicated region
  $region30: #{bce_dice_loss.1} parent=0 // pred_check
    _
  $region31: #{bce_dice_loss.1} parent=0 // pred_check_branch
    %320 = sbr.rel (0) target = $region33
  $region32: #{bce_dice_loss.1} parent=0 // pred_region
    _
  $region33: #{bce_dice_loss.1} parent=0 // pred_fallthru
    _
  // Predicated region
  $region34: #{bce_dice_loss.1} parent=0 // pred_check
    _
  $region35: #{bce_dice_loss.1} parent=0 // pred_check_branch
    %322 = sbr.rel (0) target = $region37
  $region36: #{bce_dice_loss.1} parent=0 // pred_region
    _
  $region37: #{bce_dice_loss.1} parent=0 // pred_fallthru
    _
  // Predicated region
  $region38: #{bce_dice_loss.1} parent=0 // pred_check
    _
  $region39: #{bce_dice_loss.1} parent=0 // pred_check_branch
    %324 = sbr.rel (0) target = $region41
  $region40: #{bce_dice_loss.1} parent=0 // pred_region
    _
  $region41: #{bce_dice_loss.1} parent=0 // pred_fallthru
    _
  // Predicated region
  $region42: #{bce_dice_loss.1} parent=0 // pred_check
    _
  $region43: #{bce_dice_loss.1} parent=0 // pred_check_branch
    %326 = sbr.rel (0) target = $region45
  $region44: #{bce_dice_loss.1} parent=0 // pred_region
    _
  $region45: #{bce_dice_loss.1} parent=0 // pred_fallthru
    _
  // Predicated region
  $region46: #{bce_dice_loss.1} parent=0 // pred_check
    _
  $region47: #{bce_dice_loss.1} parent=0 // pred_check_branch
    %328 = sbr.rel (0) target = $region49
  $region48: #{bce_dice_loss.1} parent=0 // pred_region
    _
  $region49: #{bce_dice_loss.1} parent=0 // pred_fallthru
    _

</llo_original>
